<compile_context>
chip_gen: v7x
topology: tpu7x:2x2x1
jax: 0.10.0
libtpu: 0.0.40
codegen_flags: <defaults>
</compile_context>

<pallas_src>
import functools

import jax
import jax.numpy as jnp
from jax.experimental import pallas as pl
from jax.experimental.pallas import tpu as pltpu

EPS = 1e-5  # nn.LayerNorm default eps


def _prenorm_kernel(x_ref, gamma_ref, beta_ref, w_ref, b_ref, o_ref, *,
                    matmul_dtype):
    # x_ref:     (TR, D)   tile of flattened (batch*seq) rows
    # gamma_ref: (1, D)    LayerNorm weight
    # beta_ref:  (1, D)    LayerNorm bias
    # w_ref:     (D, TH)   fn (Linear) weight tile, (in, out) layout
    # b_ref:     (1, TH)   fn (Linear) bias tile
    # o_ref:     (TR, TH)

    # --- LayerNorm over the full last dim; statistics in f32 (matches torch).
    # (Rows belonging to the ragged tail block may hold arbitrary values; the
    # math below is row-wise so they cannot contaminate valid rows, and their
    # output rows are masked on store.)
    x = x_ref[...].astype(jnp.float32)
    mean = jnp.mean(x, axis=-1, keepdims=True)                # XLU reduce
    centered = x - mean
    var = jnp.mean(centered * centered, axis=-1, keepdims=True)
    inv = jax.lax.rsqrt(var + EPS)                            # EUP rsqrt
    normed = (centered * inv) * gamma_ref[...].astype(jnp.float32) \
        + beta_ref[...].astype(jnp.float32)

    # --- fn: Linear(in_channels -> hidden) on the MXU.  Operands cast to
    # matmul_dtype (bf16 by default); accumulation stays f32.
    y = jnp.dot(normed.astype(matmul_dtype), w_ref[...].astype(matmul_dtype),
                preferred_element_type=jnp.float32)
    y = y + b_ref[...].astype(jnp.float32)
    o_ref[...] = y.astype(o_ref.dtype)


def _auto_row_tile(rows: int) -> int:
    # Cap at 512 rows (~85% of HBM roofline on v6e tiling measurements) while
    # keeping >= ~8 grid steps along rows (>= 4 per TensorCore on dual-TC
    # v7x) so the auto double-buffer pipeline always has work to overlap.
    # Always a multiple of the 8-row sublane granularity.
    tile = ((rows // 8) // 8) * 8
    return max(8, min(512, tile))


def prenorm_fn(x, gamma, beta, w, b, *, row_tile=None, h_tile=None,
               matmul_dtype=jnp.bfloat16, vmem_limit_bytes=None):
    """Fused PreNorm forward: Linear(LayerNorm(x)).

    x: (B, S, D) -> (B, S, H) where H = w.shape[1].
    """
    B, S, D = x.shape
    H = w.shape[1]
    rows = B * S

    if row_tile is None:
        row_tile = _auto_row_tile(rows)
    if h_tile is None:
        # Keep the full H resident unless it is ViT-MLP sized; then tile it
        # (keeps W / out tiles small against v7x's 64 MiB physical VMEM and
        # gives the dual TensorCores more parallel steps).
        h_tile = H if H <= 2048 else 1024

    n_row = pl.cdiv(rows, row_tile)   # ragged final block handled by Pallas
    n_h = pl.cdiv(H, h_tile)

    x2 = x.reshape(rows, D)           # contiguous reshape: no copy
    gamma2 = gamma.reshape(1, D)
    beta2 = beta.reshape(1, D)
    b2 = b.reshape(1, H)

    # gamma/beta never change across the grid; W/b only change along the H
    # axis, so they can be single-buffered whenever there is no H tiling.
    invariant = pl.Buffered(1)
    w_mode = invariant if n_h == 1 else None

    bytes_accessed = (
        x2.size * x2.dtype.itemsize          # x read
        + rows * H * x.dtype.itemsize        # out write
        + w.size * w.dtype.itemsize          # weight
        + gamma.size * gamma.dtype.itemsize
        + beta.size * beta.dtype.itemsize
        + b.size * b.dtype.itemsize)
    cost = pl.CostEstimate(
        flops=2 * rows * D * H,
        transcendentals=rows * n_h,          # one rsqrt per row (per H tile)
        bytes_accessed=bytes_accessed)

    out = pl.pallas_call(
        functools.partial(_prenorm_kernel, matmul_dtype=matmul_dtype),
        out_shape=jax.ShapeDtypeStruct((rows, H), x.dtype),
        grid_spec=pltpu.PrefetchScalarGridSpec(
            num_scalar_prefetch=0,
            grid=(n_row, n_h),
            in_specs=[
                pl.BlockSpec((row_tile, D), lambda i, j: (i, 0)),    # x rows
                pl.BlockSpec((1, D), lambda i, j: (0, 0),
                             pipeline_mode=invariant),               # gamma
                pl.BlockSpec((1, D), lambda i, j: (0, 0),
                             pipeline_mode=invariant),               # beta
                pl.BlockSpec((D, h_tile), lambda i, j: (0, j),
                             pipeline_mode=w_mode),                  # W
                pl.BlockSpec((1, h_tile), lambda i, j: (0, j),
                             pipeline_mode=w_mode),                  # b
            ],
            out_specs=pl.BlockSpec((row_tile, h_tile), lambda i, j: (i, j)),
        ),
        compiler_params=pltpu.CompilerParams(
            dimension_semantics=("parallel", "parallel"),
            vmem_limit_bytes=vmem_limit_bytes,   # None -> default scoped limit
        ),
        cost_estimate=cost,
    )(x2, gamma2, beta2, w, b2)

    return out.reshape(B, S, H)


def _reference(x, gamma, beta, w, b):
    xf = x.astype(jnp.float32)
    mean = jnp.mean(xf, axis=-1, keepdims=True)
    var = jnp.mean((xf - mean) ** 2, axis=-1, keepdims=True)
    normed = (xf - mean) / jnp.sqrt(var + EPS) * gamma.astype(jnp.float32) \
        + beta.astype(jnp.float32)
    return normed @ w.astype(jnp.float32) + b.astype(jnp.float32)


if __name__ == "__main__":
    key = jax.random.PRNGKey(0)
    k1, k2, k3, k4, k5 = jax.random.split(key, 5)

    # ViT token layout (batch, seq, in_channels).  D and H are multiples of
    # 128 (lane-dense loads/stores).  B*S = 400 is deliberately NOT a
    # multiple of the auto row tile (48) so the ragged final block is
    # exercised without any wrapper pad/slice.
    B, S, D, H = 2, 200, 128, 256

    x = jax.random.normal(k1, (B, S, D), dtype=jnp.float32)
    # LayerNorm affine params (non-trivial so the affine path is tested).
    gamma = 1.0 + 0.1 * jax.random.normal(k2, (D,), dtype=jnp.float32)
    beta = 0.05 * jax.random.normal(k3, (D,), dtype=jnp.float32)
    # fn (Linear) params, deterministic synthetic init.
    w = 0.02 * jax.random.normal(k4, (D, H), dtype=jnp.float32)
    b = 0.01 * jax.random.normal(k5, (H,), dtype=jnp.float32)

    ref = _reference(x, gamma, beta, w, b)

    # 1) Exact f32 MXU path (numerics sanity).
    out_f32 = jax.block_until_ready(
        prenorm_fn(x, gamma, beta, w, b, matmul_dtype=jnp.float32))
    assert out_f32.shape == (B, S, H)
    assert jnp.allclose(out_f32, ref, atol=1e-5, rtol=1e-5), \
        "f32 mismatch vs reference"

    # 2) Default path: bf16 MXU operands, f32 LN stats + f32 accumulation.
    out_def = jax.block_until_ready(prenorm_fn(x, gamma, beta, w, b))
    assert jnp.allclose(out_def, ref, atol=5e-2, rtol=5e-2), \
        "bf16-MXU mismatch vs reference"

    # 3) H-tiled path (2 steps along H) exercising the ViT-sized-W tiling.
    out_ht = jax.block_until_ready(prenorm_fn(x, gamma, beta, w, b, h_tile=128))
    assert jnp.allclose(out_ht, ref, atol=5e-2, rtol=5e-2), \
        "H-tiled mismatch vs reference"

    # 4) bf16 storage for x / W / b / out (halves dominant HBM traffic;
    #    recommended especially on v5e).  LN stats / accumulation stay f32.
    xb = x.astype(jnp.bfloat16)
    wb = w.astype(jnp.bfloat16)
    bb = b.astype(jnp.bfloat16)
    out_b = jax.block_until_ready(prenorm_fn(xb, gamma, beta, wb, bb))
    refb = _reference(xb, gamma, beta, wb, bb)
    assert out_b.shape == (B, S, H) and out_b.dtype == jnp.bfloat16
    assert jnp.allclose(out_b.astype(jnp.float32), refb, atol=1e-1, rtol=1e-1), \
        "bf16-storage mismatch vs reference"

    print("KERNEL_OK")
</pallas_src>

<mosaic_0001>
module attributes {stable_mosaic.version = 11 : i64} {
  func.func @_prenorm_kernel(%arg0: i32, %arg1: i32, %arg2: memref<48x128xf32, #tpu.memory_space<vmem>>, %arg3: memref<1x128xf32, #tpu.memory_space<vmem>>, %arg4: memref<1x128xf32, #tpu.memory_space<vmem>>, %arg5: memref<128x256xf32, #tpu.memory_space<vmem>>, %arg6: memref<1x256xf32, #tpu.memory_space<vmem>>, %arg7: memref<48x256xf32, #tpu.memory_space<vmem>>) attributes {dimension_semantics = [#tpu.dimension_semantics<parallel>, #tpu.dimension_semantics<parallel>], iteration_bounds = array<i64: 9, 1>, scalar_prefetch = 0 : i64, scratch_operands = 0 : i64, tpu.core_type = #tpu.core_type<tc>, window_params = [{transform_indices = @transform_0, window_bounds = array<i64: 48, 128>}, {pipeline_mode = #tpu.pipeline_mode<synchronous>, transform_indices = @transform_1, window_bounds = array<i64: 1, 128>}, {pipeline_mode = #tpu.pipeline_mode<synchronous>, transform_indices = @transform_2, window_bounds = array<i64: 1, 128>}, {pipeline_mode = #tpu.pipeline_mode<synchronous>, transform_indices = @transform_3, window_bounds = array<i64: 128, 256>}, {pipeline_mode = #tpu.pipeline_mode<synchronous>, transform_indices = @transform_4, window_bounds = array<i64: 1, 256>}, {transform_indices = @transform_5, window_bounds = array<i64: 48, 256>}]} {
    %c0 = arith.constant 0 : index
    %c0_0 = arith.constant 0 : index
    %0 = vector.load %arg2[%c0, %c0_0] : memref<48x128xf32, #tpu.memory_space<vmem>>, vector<48x128xf32>
    %cst = arith.constant dense<0.000000e+00> : vector<48xf32>
    %1 = vector.multi_reduction <add>, %0, %cst [1] : vector<48x128xf32> to vector<48xf32>
    %2 = vector.shape_cast %1 : vector<48xf32> to vector<48x1xf32>
    %cst_1 = arith.constant 1.280000e+02 : f32
    %3 = vector.broadcast %cst_1 : f32 to vector<48x1xf32>
    %4 = arith.divf %2, %3 : vector<48x1xf32>
    %5 = vector.broadcast %4 : vector<48x1xf32> to vector<48x128xf32>
    %6 = arith.subf %0, %5 : vector<48x128xf32>
    %7 = arith.mulf %6, %6 : vector<48x128xf32>
    %cst_2 = arith.constant dense<0.000000e+00> : vector<48xf32>
    %8 = vector.multi_reduction <add>, %7, %cst_2 [1] : vector<48x128xf32> to vector<48xf32>
    %9 = vector.shape_cast %8 : vector<48xf32> to vector<48x1xf32>
    %cst_3 = arith.constant 1.280000e+02 : f32
    %10 = vector.broadcast %cst_3 : f32 to vector<48x1xf32>
    %11 = arith.divf %9, %10 : vector<48x1xf32>
    %cst_4 = arith.constant 9.99999974E-6 : f32
    %12 = vector.broadcast %cst_4 : f32 to vector<48x1xf32>
    %13 = arith.addf %11, %12 : vector<48x1xf32>
    %14 = math.rsqrt %13 : vector<48x1xf32>
    %15 = vector.broadcast %14 : vector<48x1xf32> to vector<48x128xf32>
    %16 = arith.mulf %6, %15 : vector<48x128xf32>
    %c0_5 = arith.constant 0 : index
    %c0_6 = arith.constant 0 : index
    %17 = vector.load %arg3[%c0_5, %c0_6] : memref<1x128xf32, #tpu.memory_space<vmem>>, vector<1x128xf32>
    %18 = vector.broadcast %17 : vector<1x128xf32> to vector<48x128xf32>
    %19 = arith.mulf %16, %18 : vector<48x128xf32>
    %c0_7 = arith.constant 0 : index
    %c0_8 = arith.constant 0 : index
    %20 = vector.load %arg4[%c0_7, %c0_8] : memref<1x128xf32, #tpu.memory_space<vmem>>, vector<1x128xf32>
    %21 = vector.broadcast %20 : vector<1x128xf32> to vector<48x128xf32>
    %22 = arith.addf %19, %21 : vector<48x128xf32>
    %c0_9 = arith.constant 0 : index
    %c0_10 = arith.constant 0 : index
    %23 = vector.load %arg5[%c0_9, %c0_10] : memref<128x256xf32, #tpu.memory_space<vmem>>, vector<128x256xf32>
    %cst_11 = arith.constant dense<0.000000e+00> : vector<48x256xf32>
    %24 = tpu.matmul %22, %23, %cst_11 {dimension_numbers = #tpu.dot_dimension_numbers<[1], [0], [0], [1], [0, 0, 1, 1], [], []>} : vector<48x128xf32>, vector<128x256xf32>, vector<48x256xf32> -> vector<48x256xf32>
    %c0_12 = arith.constant 0 : index
    %c0_13 = arith.constant 0 : index
    %25 = vector.load %arg6[%c0_12, %c0_13] : memref<1x256xf32, #tpu.memory_space<vmem>>, vector<1x256xf32>
    %26 = vector.broadcast %25 : vector<1x256xf32> to vector<48x256xf32>
    %27 = arith.addf %24, %26 : vector<48x256xf32>
    %c0_14 = arith.constant 0 : index
    %c0_15 = arith.constant 0 : index
    %28 = vector.load %arg7[%c0_14, %c0_15] : memref<48x256xf32, #tpu.memory_space<vmem>>, vector<48x256xf32>
    tpu.vector_store %arg7[%c0_14, %c0_15], %27 {strides = array<i32>} : memref<48x256xf32, #tpu.memory_space<vmem>>, vector<48x256xf32>,
    return
  }
  func.func @transform_0(%arg0: i32, %arg1: i32) -> (i32, i32) {
    %c0_i32 = arith.constant 0 : i32
    %c0_i32_0 = arith.constant 0 : i32
    return %arg0, %c0_i32 : i32, i32
  }
  func.func @transform_1(%arg0: i32, %arg1: i32) -> (i32, i32) {
    %c0_i32 = arith.constant 0 : i32
    %c0_i32_0 = arith.constant 0 : i32
    %c0_i32_1 = arith.constant 0 : i32
    return %c0_i32, %c0_i32_0 : i32, i32
  }
  func.func @transform_2(%arg0: i32, %arg1: i32) -> (i32, i32) {
    %c0_i32 = arith.constant 0 : i32
    %c0_i32_0 = arith.constant 0 : i32
    %c0_i32_1 = arith.constant 0 : i32
    return %c0_i32, %c0_i32_0 : i32, i32
  }
  func.func @transform_3(%arg0: i32, %arg1: i32) -> (i32, i32) {
    %c0_i32 = arith.constant 0 : i32
    %c0_i32_0 = arith.constant 0 : i32
    return %c0_i32, %arg1 : i32, i32
  }
  func.func @transform_4(%arg0: i32, %arg1: i32) -> (i32, i32) {
    %c0_i32 = arith.constant 0 : i32
    %c0_i32_0 = arith.constant 0 : i32
    return %c0_i32, %arg1 : i32, i32
  }
  func.func @transform_5(%arg0: i32, %arg1: i32) -> (i32, i32) {
    %c0_i32 = arith.constant 0 : i32
    return %arg0, %arg1 : i32, i32
  }
}

</mosaic_0001>

<llo_original>
// kernel: tpu_custom_call.1
$region0: #{tpu_custom_call.1}
  #allocation0 [shape = 'u32[]', space=smem, size = 0x4, offset = 0x4, fixed_abs, tag = 'smem constant byte address 0x4 - core index']
  #allocation1 [shape = 'u32[144,128]{1,0:T(1,128)}', space=vmem, size = 0x12000, scoped, tag = 'internal scratch']
  %s0 = inlined_call_operand.hbm [shape: f32[400,128], index: 0, kind: input, shape index: {}]
  %s1 = inlined_call_operand.vmem [shape: f32[1,128], index: 1, kind: input, shape index: {}]
  %s2 = inlined_call_operand.vmem [shape: f32[1,128], index: 2, kind: input, shape index: {}]
  %s3 = inlined_call_operand.hbm [shape: f32[128,256], index: 3, kind: input, shape index: {}]
  %s4 = inlined_call_operand.vmem [shape: f32[1,256], index: 4, kind: input, shape index: {}]
  %s5 = inlined_call_operand.hbm [shape: f32[400,256], index: 5, kind: output, shape index: {}]
  %s6 = sld [smem:[#allocation0]]
  $region61: #{tpu_custom_call.1} parent=0
    _
  %s8 = ssub.s32 1, %s6
  %s9 = scalar_select 0, %s8, %s6
  $region1: #{tpu_custom_call.1} parent=0
    #allocation2 [shape = 'u8[49152]{0}', space=vmem, size = 0xc000, scoped, tag = 'input window, operand 0']
    #allocation3 [shape = 's32[2]{0}', space=sflag, size = 0x8, scoped, tag = 'scoped memory for tpu_custom_call.1']
    #allocation4 [shape = 's32[2]{0}', space=sflag, size = 0x8, scoped, tag = 'scoped memory for tpu_custom_call.1']
    #allocation5 [shape = 'u8[131072]{0}', space=vmem, size = 0x20000, scoped, tag = 'input window, operand 3, single buffered']
    #allocation6 [shape = 's32[1]{0}', space=sflag, size = 0x4, scoped, tag = 'scoped memory for tpu_custom_call.1']
    #allocation7 [shape = 'u8[98304]{0}', space=vmem, size = 0x18000, scoped, tag = 'output window, operand 0']
    %10 = vsyncpa [#allocation3], 0
    %s11 = scalar_lea.sflag [#allocation3], 1
    %12 = vsyncpa %s11, 0
    %13 = vsyncpa [#allocation6], 0
    %14 = vsyncpa [#allocation4], 0
    %s15 = scalar_lea.sflag [#allocation4], 1
    %16 = vsyncpa %s15, 0
    loop: start=0, step=1, limit=11
    $region2: #{tpu_custom_call.1} parent=1 // loop_pre_header
      _
    $region3: #{tpu_custom_call.1} parent=1 // loop_header
      %s18 = sphi 0, %s22
      %p19 = scmp.ge.s32.totalorder %s18, 11
      %s25 = sphi 0, %s37
      %s26 = sphi 0, %s33
      %s27 = sphi 0, %s25
      %s28 = sphi 0, %s26
      %s29 = sphi 0, %s27
      %s30 = sphi 0, %s28
      %s40 = sphi 0, %s42
      %s43 = sphi 0, %s40
      %s44 = sphi 0, %s43
      %s60 = sphi 0, %s44
      %s64 = sphi 0, %s64
      %s66 = sphi 0, %s64
      %s67 = sphi 0, %s66
      %s81 = sphi 0, %s67
      %s85 = sphi 0, %s85
      %s87 = sphi 0, %s85
      %s88 = sphi 0, %s87
      %s102 = sphi 0, %s88
      %s108 = sphi 0, %s110
      %s111 = sphi 0, %s108
      %s112 = sphi 0, %s111
      %s128 = sphi 0, %s112
      %s134 = sphi 0, %s136
      %s137 = sphi 0, %s134
      %s138 = sphi 0, %s137
      %s154 = sphi 0, %s138
      %s162 = sphi 0, %s164
      %s165 = sphi 0, %s162
      %s166 = sphi 0, %s165
      %s182 = sphi 0, %s166
    $region4: #{tpu_custom_call.1} parent=1 // loop_header_branch
      %21 = sbr.rel (%p19) target = $region8
    $region5: #{tpu_custom_call.1} parent=1 // loop_body
      %s23 = ssub.s32 %s18, 1
      %s24 = ssub.s32 %s18, 2
      %s31 = sadd.s32 1, %s26
      %p32 = scmp.ge.s32.totalorder %s31, 1
      %s33 = scalar_select %p32, 0, %s31
      %s34 = sadd.s32 1, %s25
      %s35 = scalar_select %p32, %s34, %s25
      %p36 = scmp.ge.s32.totalorder %s35, 9
      %s37 = scalar_select %p36, 0, %s35
      %s38 = ssub.s32 %s25, %s37
      %p39 = scmp.eq.s32.totalorder %s38, 0
      %s41 = sadd.s32 %s40, 1
      %s42 = scalar_select %p39, %s40, %s41
      %p45 = pneg %p39
      %p46 = scmp.eq.s32.totalorder %s18, 8
      %p47 = por %p45, %p46
      %p48 = scmp.ne.s32.totalorder %s40, %s43
      %p49 = scmp.eq.s32.totalorder %s18, 0
      %p50 = por %p48, %p49
      %p51 = scmp.ne.s32.totalorder %s40, %s43
      %p52 = scmp.eq.s32.totalorder %s23, 8
      %p53 = por %p51, %p52
      %p54 = scmp.ne.s32.totalorder %s43, %s44
      %p55 = scmp.eq.s32.totalorder %s23, 0
      %p56 = por %p54, %p55
      %p57 = scmp.ne.s32.totalorder %s43, %s44
      %p58 = scmp.eq.s32.totalorder %s24, 8
      %p59 = por %p57, %p58
      %p61 = scmp.ne.s32.totalorder %s44, %s60
      %p62 = scmp.eq.s32.totalorder %s24, 0
      %p63 = por %p61, %p62
      %s65 = sadd.s32 %s64, 1
      %p68 = scmp.eq.s32.totalorder %s18, 8
      %p69 = scmp.ne.s32.totalorder %s64, %s66
      %p70 = scmp.eq.s32.totalorder %s18, 0
      %p71 = por %p69, %p70
      %p72 = scmp.ne.s32.totalorder %s64, %s66
      %p73 = scmp.eq.s32.totalorder %s23, 8
      %p74 = por %p72, %p73
      %p75 = scmp.ne.s32.totalorder %s66, %s67
      %p76 = scmp.eq.s32.totalorder %s23, 0
      %p77 = por %p75, %p76
      %p78 = scmp.ne.s32.totalorder %s66, %s67
      %p79 = scmp.eq.s32.totalorder %s24, 8
      %p80 = por %p78, %p79
      %p82 = scmp.ne.s32.totalorder %s67, %s81
      %p83 = scmp.eq.s32.totalorder %s24, 0
      %p84 = por %p82, %p83
      %s86 = sadd.s32 %s85, 1
      %p89 = scmp.eq.s32.totalorder %s18, 8
      %p90 = scmp.ne.s32.totalorder %s85, %s87
      %p91 = scmp.eq.s32.totalorder %s18, 0
      %p92 = por %p90, %p91
      %p93 = scmp.ne.s32.totalorder %s85, %s87
      %p94 = scmp.eq.s32.totalorder %s23, 8
      %p95 = por %p93, %p94
      %p96 = scmp.ne.s32.totalorder %s87, %s88
      %p97 = scmp.eq.s32.totalorder %s23, 0
      %p98 = por %p96, %p97
      %p99 = scmp.ne.s32.totalorder %s87, %s88
      %p100 = scmp.eq.s32.totalorder %s24, 8
      %p101 = por %p99, %p100
      %p103 = scmp.ne.s32.totalorder %s88, %s102
      %p104 = scmp.eq.s32.totalorder %s24, 0
      %p105 = por %p103, %p104
      %s106 = ssub.s32 %s26, %s33
      %p107 = scmp.eq.s32.totalorder %s106, 0
      %s109 = sadd.s32 %s108, 1
      %s110 = scalar_select %p107, %s108, %s109
      %p113 = pneg %p107
      %p114 = scmp.eq.s32.totalorder %s18, 8
      %p115 = por %p113, %p114
      %p116 = scmp.ne.s32.totalorder %s108, %s111
      %p117 = scmp.eq.s32.totalorder %s18, 0
      %p118 = por %p116, %p117
      %p119 = scmp.ne.s32.totalorder %s108, %s111
      %p120 = scmp.eq.s32.totalorder %s23, 8
      %p121 = por %p119, %p120
      %p122 = scmp.ne.s32.totalorder %s111, %s112
      %p123 = scmp.eq.s32.totalorder %s23, 0
      %p124 = por %p122, %p123
      %p125 = scmp.ne.s32.totalorder %s111, %s112
      %p126 = scmp.eq.s32.totalorder %s24, 8
      %p127 = por %p125, %p126
      %p129 = scmp.ne.s32.totalorder %s112, %s128
      %p130 = scmp.eq.s32.totalorder %s24, 0
      %p131 = por %p129, %p130
      %s132 = ssub.s32 %s26, %s33
      %p133 = scmp.eq.s32.totalorder %s132, 0
      %s135 = sadd.s32 %s134, 1
      %s136 = scalar_select %p133, %s134, %s135
      %p139 = pneg %p133
      %p140 = scmp.eq.s32.totalorder %s18, 8
      %p141 = por %p139, %p140
      %p142 = scmp.ne.s32.totalorder %s134, %s137
      %p143 = scmp.eq.s32.totalorder %s18, 0
      %p144 = por %p142, %p143
      %p145 = scmp.ne.s32.totalorder %s134, %s137
      %p146 = scmp.eq.s32.totalorder %s23, 8
      %p147 = por %p145, %p146
      %p148 = scmp.ne.s32.totalorder %s137, %s138
      %p149 = scmp.eq.s32.totalorder %s23, 0
      %p150 = por %p148, %p149
      %p151 = scmp.ne.s32.totalorder %s137, %s138
      %p152 = scmp.eq.s32.totalorder %s24, 8
      %p153 = por %p151, %p152
      %p155 = scmp.ne.s32.totalorder %s138, %s154
      %p156 = scmp.eq.s32.totalorder %s24, 0
      %p157 = por %p155, %p156
      %s158 = ssub.s32 %s25, %s37
      %s159 = ssub.s32 %s26, %s33
      %s160 = sor.u32 %s158, %s159
      %p161 = scmp.eq.s32.totalorder %s160, 0
      %s163 = sadd.s32 %s162, 1
      %s164 = scalar_select %p161, %s162, %s163
      %p167 = pneg %p161
      %p168 = scmp.eq.s32.totalorder %s18, 8
      %p169 = por %p167, %p168
      %p170 = scmp.ne.s32.totalorder %s162, %s165
      %p171 = scmp.eq.s32.totalorder %s18, 0
      %p172 = por %p170, %p171
      %p173 = scmp.ne.s32.totalorder %s162, %s165
      %p174 = scmp.eq.s32.totalorder %s23, 8
      %p175 = por %p173, %p174
      %p176 = scmp.ne.s32.totalorder %s165, %s166
      %p177 = scmp.eq.s32.totalorder %s23, 0
      %p178 = por %p176, %p177
      %p179 = scmp.ne.s32.totalorder %s165, %s166
      %p180 = scmp.eq.s32.totalorder %s24, 8
      %p181 = por %p179, %p180
      %p183 = scmp.ne.s32.totalorder %s166, %s182
      %p184 = scmp.eq.s32.totalorder %s24, 0
      %p185 = por %p183, %p184
      %p186 = scmp.le.s32.totalorder 1, %s18
      %p187 = scmp.lt.s32.totalorder %s18, 10
      %p188 = pnand %p186, %p187
      %p189 = pneg %p188
      // Predicated region
      $region9: #{tpu_custom_call.1} parent=5 // pred_check
        _
      $region10: #{tpu_custom_call.1} parent=5 // pred_check_branch
        %191 = sbr.rel (%p188) target = $region12
      $region11: #{tpu_custom_call.1} parent=5 // pred_region
        %s192 = ssub.s32 %s18, 1
        // Predicated region
        $region13: #{tpu_custom_call.1} parent=11 // pred_check
          %p193 = pneg %p77
        $region14: #{tpu_custom_call.1} parent=11 // pred_check_branch
          %195 = sbr.rel (%p193) target = $region16
        $region15: #{tpu_custom_call.1} parent=11 // pred_region
          _
        $region16: #{tpu_custom_call.1} parent=11 // pred_fallthru
          _
        // Predicated region
        $region17: #{tpu_custom_call.1} parent=11 // pred_check
          %p196 = pneg %p98
        $region18: #{tpu_custom_call.1} parent=11 // pred_check_branch
          %198 = sbr.rel (%p196) target = $region20
        $region19: #{tpu_custom_call.1} parent=11 // pred_region
          _
        $region20: #{tpu_custom_call.1} parent=11 // pred_fallthru
          _
        // Predicated region
        $region21: #{tpu_custom_call.1} parent=11 // pred_check
          %p199 = pneg %p124
        $region22: #{tpu_custom_call.1} parent=11 // pred_check_branch
          %201 = sbr.rel (%p199) target = $region24
        $region23: #{tpu_custom_call.1} parent=11 // pred_region
          %s202 = smul.u32 2, %s28
          %s204 = ssub.s32 4096, 4096
          %205 = vsyncadd [#allocation6], %s204
          %s206 = smul.addr %s202, 128
          %s207 = scalar_lea.hbm %s3, %s206
          %s208 = sshll.u32 [#allocation5], 4
          %s209 = int_to_ptr.vmem [resolvable:$true] %s208
          %214 = dma.hbm_to_vmem [thread:$0]  %s207, 4096, %s209, [#allocation6], 256, 256, 16
        $region24: #{tpu_custom_call.1} parent=11 // pred_fallthru
          _
        // Predicated region
        $region25: #{tpu_custom_call.1} parent=11 // pred_check
          %p215 = pneg %p150
        $region26: #{tpu_custom_call.1} parent=11 // pred_check_branch
          %217 = sbr.rel (%p215) target = $region28
        $region27: #{tpu_custom_call.1} parent=11 // pred_region
          %s218 = smul.u32 2, %s28
          %p219 = scmp.lt.s32.totalorder %s218, 1
          %s220 = scalar_select %p219, %s218, 1
          %s221 = scalar_lea.vmem %s4, %s220
          %s222 = smul.u32 2, %s28
        $region28: #{tpu_custom_call.1} parent=11 // pred_fallthru
          _
      $region12: #{tpu_custom_call.1} parent=5 // pred_fallthru
        _
      %p223 = scmp.lt.s32.totalorder %s18, 9
      // Predicated region
      $region29: #{tpu_custom_call.1} parent=5 // pred_check
        %p224 = pneg %p223
      $region30: #{tpu_custom_call.1} parent=5 // pred_check_branch
        %226 = sbr.rel (%p224) target = $region32
      $region31: #{tpu_custom_call.1} parent=5 // pred_region
        // Predicated region
        $region33: #{tpu_custom_call.1} parent=31 // pred_check
          %p227 = pneg %p50
        $region34: #{tpu_custom_call.1} parent=31 // pred_check_branch
          %229 = sbr.rel (%p227) target = $region36
        $region35: #{tpu_custom_call.1} parent=31 // pred_region
          %s230 = sand.u32 %s40, 1
          %s231 = scalar_lea.sflag [#allocation3], %s230
          %s232 = sand.u32 %s40, 1
          %s233 = smul.addr %s232, 48
          %s234 = scalar_lea.vmem [#allocation2], %s233
          %s235 = smul.u32 6, %s25
          %s236 = ssub.s32 50, %s235
          %p237 = scmp.lt.s32.totalorder %s236, 6
          %s238 = scalar_select %p237, %s236, 6
          %s239 = smul.u32 128, %s238
          %s241 = ssub.s32 768, %s239
          %242 = vsyncadd %s231, %s241
          %p243 = scmp.ne.s32.totalorder 0, %s239
          %s244 = smul.addr %s235, 128
          %s245 = scalar_lea.hbm %s0, %s244
          %s246 = smul.u32 8, %s238
          %s247 = sshll.u32 %s234, 4
          %s248 = int_to_ptr.vmem [resolvable:$true] %s247
          %s249 = sshll.u32 %s246, 4
          %253 = dma.hbm_to_vmem [thread:$0]  (%p243), %s245, %s249, %s248, %s231, 128, 128, 8
        $region36: #{tpu_custom_call.1} parent=31 // pred_fallthru
          _
      $region32: #{tpu_custom_call.1} parent=5 // pred_fallthru
        _
      %p254 = scmp.le.s32.totalorder 1, %s18
      %p255 = scmp.lt.s32.totalorder %s18, 10
      %p256 = pnand %p254, %p255
      %p257 = pneg %p256
      // Predicated region
      $region37: #{tpu_custom_call.1} parent=5 // pred_check
        _
      $region38: #{tpu_custom_call.1} parent=5 // pred_check_branch
        %259 = sbr.rel (%p256) target = $region40
      $region39: #{tpu_custom_call.1} parent=5 // pred_region
        %s260 = ssub.s32 %s18, 1
        %s261 = sand.u32 %s43, 1
        %s262 = scalar_lea.sflag [#allocation3], %s261
        %s263 = sand.u32 %s43, 1
        %s264 = smul.addr %s263, 48
        %s265 = scalar_lea.vmem [#allocation2], %s264
        // Predicated region
        $region41: #{tpu_custom_call.1} parent=39 // pred_check
          %p266 = pneg %p56
        $region42: #{tpu_custom_call.1} parent=39 // pred_check_branch
          %268 = sbr.rel (%p266) target = $region44
        $region43: #{tpu_custom_call.1} parent=39 // pred_region
          %269 = dma.done %s262, 768
        $region44: #{tpu_custom_call.1} parent=39 // pred_fallthru
          _
        // Predicated region
        $region45: #{tpu_custom_call.1} parent=39 // pred_check
          %p270 = pneg %p124
        $region46: #{tpu_custom_call.1} parent=39 // pred_check_branch
          %272 = sbr.rel (%p270) target = $region48
        $region47: #{tpu_custom_call.1} parent=39 // pred_region
          %273 = dma.done [#allocation6], 4096
        $region48: #{tpu_custom_call.1} parent=39 // pred_fallthru
          _
        %s274 = sand.u32 %s43, 1
        %s275 = scalar_lea.sflag [#allocation3], %s274
        %s276 = sand.u32 %s43, 1
        %s277 = smul.addr %s276, 48
        %s278 = scalar_lea.vmem [#allocation2], %s277
        %p279 = pneg %p56
        %p280 = pneg %p53
        %p281 = pneg %p77
        %p282 = pneg %p74
        %p283 = pneg %p98
        %p284 = pneg %p95
        %p285 = pneg %p124
        %p286 = pneg %p121
        %s287 = smul.u32 2, %s28
        %p288 = scmp.lt.s32.totalorder %s287, 1
        %s289 = scalar_select %p288, %s287, 1
        %s290 = scalar_lea.vmem %s4, %s289
        %p291 = pneg %p150
        %p292 = pneg %p147
        %p293 = pneg %p178
        %p294 = pneg %p175
        %s295 = sand.u32 %s165, 1
        %s296 = scalar_lea.sflag [#allocation4], %s295
        %s297 = sand.u32 %s165, 1
        %s298 = smul.addr %s297, 96
        %s299 = scalar_lea.vmem [#allocation7], %s298
        %s300 = smul.u32 6, %s27
        %s301 = ssub.s32 50, %s300
        %p302 = scmp.lt.s32.totalorder %s301, 6
        %s303 = scalar_select %p302, %s301, 6
        %s304 = smul.u32 128, %s303
        %s305 = smul.u32 2, %s28
        %s306 = smul.u32 2, %s28
        %p307 = scmp.lt.s32.totalorder %s306, 1
        %s308 = scalar_select %p307, %s306, 1
        %s309 = scalar_lea.vmem %s4, %s308
        %s310 = smul.u32 2, %s28
        %s311 = smul.u32 6, %s27
        %s312 = smul.u32 2, %s28
        %s313 = ssub.s32 50, %s311
        %p314 = scmp.lt.s32.totalorder %s313, 6
        %s315 = scalar_select %p314, %s313, 6
        %s316 = smul.u32 128, %s315
        %s317 = smul.u32 %s316, 2
        %v318 = vld [vmem:[%s265] sm:$0xff]
        %v319 = vld [vmem:[%s265 + $0x8] sm:$0xff]
        %v320 = vld [vmem:[%s265 + $0x10] sm:$0xff]
        %v321 = vld [vmem:[%s265 + $0x18] sm:$0xff]
        %v322 = vld [vmem:[%s265 + $0x20] sm:$0xff]
        %v323 = vld [vmem:[%s265 + $0x28] sm:$0xff]
        %324 = vadd.xlane.f32.xlu0 %v318
        %v325 = vpop.xlane.xlu0 %324
        %326 = vadd.xlane.f32.xlu0 %v319
        %v327 = vpop.xlane.xlu0 %326
        %328 = vadd.xlane.f32.xlu0 %v320
        %v329 = vpop.xlane.xlu0 %328
        %330 = vadd.xlane.f32.xlu0 %v321
        %v331 = vpop.xlane.xlu0 %330
        %332 = vadd.xlane.f32.xlu0 %v322
        %v333 = vpop.xlane.xlu0 %332
        %334 = vadd.xlane.f32.xlu0 %v323
        %v335 = vpop.xlane.xlu0 %334
        %v336 = vrcp.pop 128.0
        %v337 = vmul.f32 %v325, %v336
        %v338 = vmul.f32 %v327, %v336
        %v339 = vmul.f32 %v329, %v336
        %v340 = vmul.f32 %v331, %v336
        %v341 = vmul.f32 %v333, %v336
        %v342 = vmul.f32 %v335, %v336
        %v343 = vsub.f32 %v318, %v337
        %v344 = vsub.f32 %v319, %v338
        %v345 = vsub.f32 %v320, %v339
        %v346 = vsub.f32 %v321, %v340
        %v347 = vsub.f32 %v322, %v341
        %v348 = vsub.f32 %v323, %v342
        %v349 = vmul.f32 %v343, %v343
        %v350 = vmul.f32 %v344, %v344
        %v351 = vmul.f32 %v345, %v345
        %v352 = vmul.f32 %v346, %v346
        %v353 = vmul.f32 %v347, %v347
        %v354 = vmul.f32 %v348, %v348
        %355 = vadd.xlane.f32.xlu0 %v349
        %v356 = vpop.xlane.xlu0 %355
        %357 = vadd.xlane.f32.xlu0 %v350
        %v358 = vpop.xlane.xlu0 %357
        %359 = vadd.xlane.f32.xlu0 %v351
        %v360 = vpop.xlane.xlu0 %359
        %361 = vadd.xlane.f32.xlu0 %v352
        %v362 = vpop.xlane.xlu0 %361
        %363 = vadd.xlane.f32.xlu0 %v353
        %v364 = vpop.xlane.xlu0 %363
        %365 = vadd.xlane.f32.xlu0 %v354
        %v366 = vpop.xlane.xlu0 %365
        %v367 = vmul.f32 %v356, %v336
        %v368 = vmul.f32 %v358, %v336
        %v369 = vmul.f32 %v360, %v336
        %v370 = vmul.f32 %v362, %v336
        %v371 = vmul.f32 %v364, %v336
        %v372 = vmul.f32 %v366, %v336
        %v373 = vadd.f32 %v367, 1e-05
        %v374 = vadd.f32 %v368, 1e-05
        %v375 = vadd.f32 %v369, 1e-05
        %v376 = vadd.f32 %v370, 1e-05
        %v377 = vadd.f32 %v371, 1e-05
        %v378 = vadd.f32 %v372, 1e-05
        %v379 = vrsqrt.pop %v373
        %v380 = vrsqrt.pop %v374
        %v381 = vrsqrt.pop %v375
        %v382 = vrsqrt.pop %v376
        %v383 = vrsqrt.pop %v377
        %v384 = vrsqrt.pop %v378
        %v385 = vmul.f32 %v343, %v379
        %v386 = vmul.f32 %v344, %v380
        %v387 = vmul.f32 %v345, %v381
        %v388 = vmul.f32 %v346, %v382
        %v389 = vmul.f32 %v347, %v383
        %v390 = vmul.f32 %v348, %v384
        %v391 = vld [vmem:[%s1] sm:$0x1]
        %v393 = vlaneseq
        %v394 = vshrl.u32 %v393, 7
        %v395 = vsub.s32 0, %v394
        %v396 = vrot.slane %v391, %v395
        %v398 = vmul.f32 %v385, %v396
        %v399 = vmul.f32 %v386, %v396
        %v400 = vmul.f32 %v387, %v396
        %v401 = vmul.f32 %v388, %v396
        %v402 = vmul.f32 %v389, %v396
        %v403 = vmul.f32 %v390, %v396
        %v404 = vld [vmem:[%s2] sm:$0x1]
        %v406 = vlaneseq
        %v407 = vshrl.u32 %v406, 7
        %v408 = vsub.s32 0, %v407
        %v409 = vrot.slane %v404, %v408
        %v411 = vadd.f32 %v398, %v409
        %v412 = vadd.f32 %v399, %v409
        %v413 = vadd.f32 %v400, %v409
        %v414 = vadd.f32 %v401, %v409
        %v415 = vadd.f32 %v402, %v409
        %v416 = vadd.f32 %v403, %v409
        %v417 = vld [vmem:[#allocation5] sm:$0xff]
        %v418 = vld [vmem:[#allocation5 + $0x8] sm:$0xff]
        %v419 = vld [vmem:[#allocation5 + $0x10] sm:$0xff]
        %v420 = vld [vmem:[#allocation5 + $0x18] sm:$0xff]
        %v421 = vld [vmem:[#allocation5 + $0x20] sm:$0xff]
        %v422 = vld [vmem:[#allocation5 + $0x28] sm:$0xff]
        %v423 = vld [vmem:[#allocation5 + $0x30] sm:$0xff]
        %v424 = vld [vmem:[#allocation5 + $0x38] sm:$0xff]
        %v425 = vld [vmem:[#allocation5 + $0x40] sm:$0xff]
        %v426 = vld [vmem:[#allocation5 + $0x48] sm:$0xff]
        %v427 = vld [vmem:[#allocation5 + $0x50] sm:$0xff]
        %v428 = vld [vmem:[#allocation5 + $0x58] sm:$0xff]
        %v429 = vld [vmem:[#allocation5 + $0x60] sm:$0xff]
        %v430 = vld [vmem:[#allocation5 + $0x68] sm:$0xff]
        %v431 = vld [vmem:[#allocation5 + $0x70] sm:$0xff]
        %v432 = vld [vmem:[#allocation5 + $0x78] sm:$0xff]
        %v433 = vld [vmem:[#allocation5 + $0x80] sm:$0xff]
        %v434 = vld [vmem:[#allocation5 + $0x88] sm:$0xff]
        %v435 = vld [vmem:[#allocation5 + $0x90] sm:$0xff]
        %v436 = vld [vmem:[#allocation5 + $0x98] sm:$0xff]
        %v437 = vld [vmem:[#allocation5 + $0xa0] sm:$0xff]
        %v438 = vld [vmem:[#allocation5 + $0xa8] sm:$0xff]
        %v439 = vld [vmem:[#allocation5 + $0xb0] sm:$0xff]
        %v440 = vld [vmem:[#allocation5 + $0xb8] sm:$0xff]
        %v441 = vld [vmem:[#allocation5 + $0xc0] sm:$0xff]
        %v442 = vld [vmem:[#allocation5 + $0xc8] sm:$0xff]
        %v443 = vld [vmem:[#allocation5 + $0xd0] sm:$0xff]
        %v444 = vld [vmem:[#allocation5 + $0xd8] sm:$0xff]
        %v445 = vld [vmem:[#allocation5 + $0xe0] sm:$0xff]
        %v446 = vld [vmem:[#allocation5 + $0xe8] sm:$0xff]
        %v447 = vld [vmem:[#allocation5 + $0xf0] sm:$0xff]
        %v448 = vld [vmem:[#allocation5 + $0xf8] sm:$0xff]
        %v449 = vld [vmem:[%s309] sm:$0x3]
        %v451 = vlaneseq
        %v452 = vshrl.u32 %v451, 7
        %v453 = vsub.s32 0, %v452
        %v454 = vrot.slane %v449, %v453
        %v455 = vlaneseq
        %v456 = vshrl.u32 %v455, 7
        %v457 = vsub.s32 1, %v456
        %v458 = vrot.slane %v449, %v457
        %461 = vmatprep.subr.mxu0 %v418
        %462 = vmatpush1.msra.mxu0 %v417
        %463 = vmatprep.subr.mxu0 %v420
        %464 = vmatpush1.msra.mxu0 %v419
        %465 = vmatprep.subr.mxu0 %v422
        %466 = vmatpush1.msra.mxu0 %v421
        %467 = vmatprep.subr.mxu0 %v424
        %468 = vmatpush1.msra.mxu0 %v423
        %469 = vmatprep.subr.mxu0 %v426
        %470 = vmatpush1.msra.mxu0 %v425
        %471 = vmatprep.subr.mxu0 %v428
        %472 = vmatpush1.msra.mxu0 %v427
        %473 = vmatprep.subr.mxu0 %v430
        %474 = vmatpush1.msra.mxu0 %v429
        %475 = vmatprep.subr.mxu0 %v432
        %476 = vmatpush1.msra.mxu0 %v431
        %477 = vmatprep.subr.mxu0 %v434
        %478 = vmatpush1.msra.mxu0 %v433
        %479 = vmatprep.subr.mxu0 %v436
        %480 = vmatpush1.msra.mxu0 %v435
        %481 = vmatprep.subr.mxu0 %v438
        %482 = vmatpush1.msra.mxu0 %v437
        %483 = vmatprep.subr.mxu0 %v440
        %484 = vmatpush1.msra.mxu0 %v439
        %485 = vmatprep.subr.mxu0 %v442
        %486 = vmatpush1.msra.mxu0 %v441
        %487 = vmatprep.subr.mxu0 %v444
        %488 = vmatpush1.msra.mxu0 %v443
        %489 = vmatprep.subr.mxu0 %v446
        %490 = vmatpush1.msra.mxu0 %v445
        %491 = vmatprep.subr.mxu0 %v448
        %492 = vmatpush1.msra.mxu0 %v447
        %493 = vmatprep.subr.mxu0 0.0
        %494 = vmatpush1.msra.mxu0 0.0
        %495 = vmatprep.subr.mxu0 0.0
        %496 = vmatpush1.msra.mxu0 0.0
        %497 = vmatprep.subr.mxu0 0.0
        %498 = vmatpush1.msra.mxu0 0.0
        %499 = vmatprep.subr.mxu0 0.0
        %500 = vmatpush1.msra.mxu0 0.0
        %501 = vmatprep.subr.mxu0 0.0
        %502 = vmatpush1.msra.mxu0 0.0
        %503 = vmatprep.subr.mxu0 0.0
        %504 = vmatpush1.msra.mxu0 0.0
        %505 = vmatprep.subr.mxu0 0.0
        %506 = vmatpush1.msra.mxu0 0.0
        %507 = vmatprep.subr.mxu0 0.0
        %508 = vmatpush1.msra.mxu0 0.0
        %509 = vmatprep.subr.mxu0 0.0
        %510 = vmatpush1.msra.mxu0 0.0
        %511 = vmatprep.subr.mxu0 0.0
        %512 = vmatpush1.msra.mxu0 0.0
        %513 = vmatprep.subr.mxu0 0.0
        %514 = vmatpush1.msra.mxu0 0.0
        %515 = vmatprep.subr.mxu0 0.0
        %516 = vmatpush1.msra.mxu0 0.0
        %517 = vmatprep.subr.mxu0 0.0
        %518 = vmatpush1.msra.mxu0 0.0
        %519 = vmatprep.subr.mxu0 0.0
        %520 = vmatpush1.msra.mxu0 0.0
        %521 = vmatprep.subr.mxu0 0.0
        %522 = vmatpush1.msra.mxu0 0.0
        %523 = vmatprep.subr.mxu0 0.0
        %524 = vmatpush1.msra.mxu0 0.0
        %525 = vmatprep.mubr.f32.mxu0 0.0
        %526 = vmatmul.mubr.f32.gmra.mrb[0].mxu0 %v411
        %v527 = vpop.f32.mrb[0].mxu0
        %v528 = vadd.f32 %v454, %v527
        %v529 = vpop.f32.mrb[0].mxu0
        %v530 = vadd.f32 %v458, %v529
        %531 = vmatprep.mubr.f32.mxu0 0.0
        %532 = vmatmul.mubr.f32.gmra.mrb[0].mxu0 %v412
        %v533 = vpop.f32.mrb[0].mxu0
        %v534 = vadd.f32 %v454, %v533
        %v535 = vpop.f32.mrb[0].mxu0
        %v536 = vadd.f32 %v458, %v535
        %537 = vmatprep.mubr.f32.mxu0 0.0
        %538 = vmatmul.mubr.f32.gmra.mrb[0].mxu0 %v413
        %v539 = vpop.f32.mrb[0].mxu0
        %v540 = vadd.f32 %v454, %v539
        %v541 = vpop.f32.mrb[0].mxu0
        %v542 = vadd.f32 %v458, %v541
        %543 = vmatprep.mubr.f32.mxu0 0.0
        %544 = vmatmul.mubr.f32.gmra.mrb[0].mxu0 %v414
        %v545 = vpop.f32.mrb[0].mxu0
        %v546 = vadd.f32 %v454, %v545
        %v547 = vpop.f32.mrb[0].mxu0
        %v548 = vadd.f32 %v458, %v547
        %549 = vmatprep.mubr.f32.mxu0 0.0
        %550 = vmatmul.mubr.f32.gmra.mrb[0].mxu0 %v415
        %v551 = vpop.f32.mrb[0].mxu0
        %v552 = vadd.f32 %v454, %v551
        %v553 = vpop.f32.mrb[0].mxu0
        %v554 = vadd.f32 %v458, %v553
        %555 = vmatprep.mubr.f32.mxu0 0.0
        %556 = vmatmul.mubr.f32.gmra.mrb[0].mxu0 %v416
        %v557 = vpop.f32.mrb[0].mxu0
        %v558 = vadd.f32 %v454, %v557
        %v559 = vpop.f32.mrb[0].mxu0
        %v560 = vadd.f32 %v458, %v559
        %561 = vdwg.mxu0
        %562 = vst [vmem:[%s299] sm:$0xff] %v528
        %563 = vst [vmem:[%s299 + $0x8] sm:$0xff] %v530
        %564 = vst [vmem:[%s299 + $0x10] sm:$0xff] %v534
        %565 = vst [vmem:[%s299 + $0x18] sm:$0xff] %v536
        %566 = vst [vmem:[%s299 + $0x20] sm:$0xff] %v540
        %567 = vst [vmem:[%s299 + $0x28] sm:$0xff] %v542
        %568 = vst [vmem:[%s299 + $0x30] sm:$0xff] %v546
        %569 = vst [vmem:[%s299 + $0x38] sm:$0xff] %v548
        %570 = vst [vmem:[%s299 + $0x40] sm:$0xff] %v552
        %571 = vst [vmem:[%s299 + $0x48] sm:$0xff] %v554
        %572 = vst [vmem:[%s299 + $0x50] sm:$0xff] %v558
        %573 = vst [vmem:[%s299 + $0x58] sm:$0xff] %v560
        %s574 = sand.u32 %s165, 1
        %s575 = scalar_lea.sflag [#allocation4], %s574
        %s576 = sand.u32 %s165, 1
        %s577 = smul.addr %s576, 96
        %s578 = scalar_lea.vmem [#allocation7], %s577
        // Predicated region
        $region49: #{tpu_custom_call.1} parent=39 // pred_check
          %p579 = pneg %p175
        $region50: #{tpu_custom_call.1} parent=39 // pred_check_branch
          %581 = sbr.rel (%p579) target = $region52
        $region51: #{tpu_custom_call.1} parent=39 // pred_region
          %s582 = smul.u32 6, %s27
          %s583 = smul.u32 2, %s28
          %s584 = ssub.s32 50, %s582
          %p585 = scmp.lt.s32.totalorder %s584, 6
          %s586 = scalar_select %p585, %s584, 6
          %s587 = smul.u32 128, %s586
          %s588 = smul.u32 %s587, 2
          %s590 = ssub.s32 1536, %s588
          %591 = vsyncadd %s575, %s590
          %p592 = scmp.ne.s32.totalorder 0, %s588
          %s593 = smul.addr %s582, 2
          %s594 = sadd.s32 %s583, %s593
          %s595 = smul.addr %s594, 128
          %s596 = scalar_lea.hbm %s5, %s595
          %s597 = smul.u32 16, %s586
          %s598 = sshll.u32 %s578, 4
          %s599 = int_to_ptr.vmem [resolvable:$true] %s598
          %s600 = sshll.u32 %s597, 4
          %604 = dma.vmem_to_hbm [thread:$0]  (%p592), %s599, %s600, %s596, %s575, 256, 256, 16
        $region52: #{tpu_custom_call.1} parent=39 // pred_fallthru
          _
      $region40: #{tpu_custom_call.1} parent=5 // pred_fallthru
        _
      %p605 = scmp.le.s32.totalorder 2, %s18
      // Predicated region
      $region53: #{tpu_custom_call.1} parent=5 // pred_check
        %p606 = pneg %p605
      $region54: #{tpu_custom_call.1} parent=5 // pred_check_branch
        %608 = sbr.rel (%p606) target = $region56
      $region55: #{tpu_custom_call.1} parent=5 // pred_region
        %s609 = ssub.s32 %s18, 2
        // Predicated region
        $region57: #{tpu_custom_call.1} parent=55 // pred_check
          %p610 = pneg %p181
        $region58: #{tpu_custom_call.1} parent=55 // pred_check_branch
          %612 = sbr.rel (%p610) target = $region60
        $region59: #{tpu_custom_call.1} parent=55 // pred_region
          %s613 = sand.u32 %s166, 1
          %s614 = scalar_lea.sflag [#allocation4], %s613
          %s615 = sand.u32 %s166, 1
          %s616 = smul.addr %s615, 96
          %s617 = scalar_lea.vmem [#allocation7], %s616
          %618 = dma.done %s614, 1536
        $region60: #{tpu_custom_call.1} parent=55 // pred_fallthru
          _
      $region56: #{tpu_custom_call.1} parent=5 // pred_fallthru
        _
    $region6: #{tpu_custom_call.1} parent=1 // loop_footer
      %s22 = sadd.s32 1, %s18
    $region7: #{tpu_custom_call.1} parent=1 // loop_footer_branch
      %17 = sbr.rel target = $region3
    $region8: #{tpu_custom_call.1} parent=1 // loop_exit
      _
    %619 = vsyncpa [#allocation3], 1
    %s620 = scalar_lea.sflag [#allocation3], 1
    %621 = vsyncpa %s620, 1
    %622 = vsyncpa [#allocation6], 1
    %623 = vsyncpa [#allocation4], 1
    %s624 = scalar_lea.sflag [#allocation4], 1
    %625 = vsyncpa %s624, 1

</llo_original>
